<compile_context>
chip_gen: v6e
topology: v6e:2x2x1
jax: 0.10.0
libtpu: 0.0.40
codegen_flags: <defaults>
</compile_context>

<pallas_src>
import jax
import jax.numpy as jnp
from jax.experimental import pallas as pl
from jax.experimental.pallas import tpu as pltpu

_COMPUTE_DTYPE = jnp.bfloat16  # MXU-native operand dtype on v5e/v6e/v7x; accum stays f32.


def _round_up(x, m):
    return ((x + m - 1) // m) * m


def _pick_tile(dim, cap, align):
    """Largest tile <= cap that divides `dim` and is `align`-aligned; else the full dim."""
    if dim <= cap:
        return dim
    for t in range(cap, 0, -1):
        if dim % t == 0 and t % align == 0:
            return t
    return dim  # full-extent block is always legal


def _tpu_budget():
    """Generation-aware VMEM limit + tile caps (budgeted per TensorCore, not per chip)."""
    try:
        vmem_cap = int(pltpu.get_tpu_info().vmem_capacity_bytes)
    except Exception:
        vmem_cap = None
    if vmem_cap is not None and vmem_cap >= 100 * 1024 * 1024:
        # v5e / v6e: 128 MiB physical VMEM -> bigger tiles cut per-grid-step overhead
        # and redundant HBM re-reads.
        return {"vmem_limit": 96 * 1024 * 1024, "mm_cap": 512, "seq_cap": 512,
                "tk_cap": 2048}
    # v7x-class (64 MiB per TensorCore) or unknown part: conservative budget, legal on
    # every generation.
    limit = 48 * 1024 * 1024
    if vmem_cap is not None:
        limit = min(limit, (3 * vmem_cap) // 4)
    return {"vmem_limit": limit, "mm_cap": 256, "seq_cap": 256, "tk_cap": 1536}


_BUDGET = _tpu_budget()


# ---------------------------------------------------------------------------
# Generic tiled matmul (output projection + odd-C QKV fallback), bf16 MXU, f32 acc.
# ---------------------------------------------------------------------------
def _make_matmul_kernel(multi_k, out_scale):
    def _finish(acc, b_ref, o_ref):
        if out_scale is not None:
            acc = acc * out_scale
        acc = acc + b_ref[...].astype(jnp.float32)
        o_ref[...] = acc.astype(o_ref.dtype)

    if not multi_k:
        # Single K tile: no accumulator scratch, no pl.when gates, one dot -> one store.
        def kernel(x_ref, w_ref, b_ref, o_ref):
            acc = jnp.dot(x_ref[...].astype(_COMPUTE_DTYPE),
                          w_ref[...].astype(_COMPUTE_DTYPE),
                          preferred_element_type=jnp.float32)
            _finish(acc, b_ref, o_ref)
        return kernel

    def kernel(x_ref, w_ref, b_ref, o_ref, acc_ref):
        @pl.when(pl.program_id(2) == 0)
        def _():
            acc_ref[...] = jnp.zeros_like(acc_ref)

        acc_ref[...] += jnp.dot(x_ref[...].astype(_COMPUTE_DTYPE),
                                w_ref[...].astype(_COMPUTE_DTYPE),
                                preferred_element_type=jnp.float32)

        @pl.when(pl.program_id(2) == pl.num_programs(2) - 1)
        def _():
            _finish(acc_ref[...], b_ref, o_ref)
    return kernel


def pallas_matmul(x, w, b=None, *, out_dtype=None, out_scale=None,
                  mm_cap=None, tk_cap=None):
    M, K = x.shape
    K2, Nout = w.shape
    assert K == K2
    mm_cap = _BUDGET["mm_cap"] if mm_cap is None else mm_cap
    tk_cap = _BUDGET["tk_cap"] if tk_cap is None else tk_cap
    out_dtype = x.dtype if out_dtype is None else out_dtype
    if b is None:
        # Zero bias keeps a single (well-tested) kernel body; the add is VPU filler.
        b = jnp.zeros((Nout,), dtype=jnp.float32)

    tm = _pick_tile(M, mm_cap, 16)       # 16: bf16 packs two rows per sublane
    tn = _pick_tile(Nout, mm_cap, 128)
    tk = _pick_tile(K, tk_cap, 128)
    nk = K // tk
    multi_k = nk > 1

    kernel = _make_matmul_kernel(multi_k, out_scale)
    b2d = b.reshape(1, Nout)

    if multi_k:
        grid = (M // tm, Nout // tn, nk)
        in_specs = [pl.BlockSpec((tm, tk), lambda i, j, k: (i, k)),
                    pl.BlockSpec((tk, tn), lambda i, j, k: (k, j)),
                    pl.BlockSpec((1, tn), lambda i, j, k: (0, j))]
        out_specs = pl.BlockSpec((tm, tn), lambda i, j, k: (i, j))
        scratch = [pltpu.VMEM((tm, tn), jnp.float32)]
        semantics = ("parallel", "parallel", "arbitrary")
    else:
        grid = (M // tm, Nout // tn)
        in_specs = [pl.BlockSpec((tm, K), lambda i, j: (i, 0)),
                    pl.BlockSpec((K, tn), lambda i, j: (0, j)),
                    pl.BlockSpec((1, tn), lambda i, j: (0, j))]
        out_specs = pl.BlockSpec((tm, tn), lambda i, j: (i, j))
        scratch = []
        semantics = ("parallel", "parallel")

    return pl.pallas_call(
        kernel,
        out_shape=jax.ShapeDtypeStruct((M, Nout), out_dtype),
        grid=grid,
        in_specs=in_specs,
        out_specs=out_specs,
        scratch_shapes=scratch,
        compiler_params=pltpu.CompilerParams(
            dimension_semantics=semantics,
            vmem_limit_bytes=_BUDGET["vmem_limit"],
        ),
        cost_estimate=pl.CostEstimate(
            flops=2 * M * K * Nout,
            transcendentals=0,
            bytes_accessed=int(int(x.dtype.itemsize) * M * K
                               + int(w.dtype.itemsize) * K * Nout
                               + int(jnp.dtype(out_dtype).itemsize) * M * Nout),
        ),
    )(x, w, b2d)


# ---------------------------------------------------------------------------
# Fused QKV projection -> three contiguous bf16 [M, C] outputs (q pre-scaled).
# ---------------------------------------------------------------------------
def _make_qkv_kernel(multi_k, q_scale):
    if not multi_k:
        def kernel(x_ref, wq_ref, wk_ref, wv_ref, q_ref, k_ref, v_ref):
            x = x_ref[...].astype(_COMPUTE_DTYPE)
            q = jnp.dot(x, wq_ref[...].astype(_COMPUTE_DTYPE),
                        preferred_element_type=jnp.float32)
            q_ref[...] = (q * q_scale).astype(q_ref.dtype)     # softmax scale folded here
            k_ref[...] = jnp.dot(x, wk_ref[...].astype(_COMPUTE_DTYPE),
                                 preferred_element_type=jnp.float32).astype(k_ref.dtype)
            v_ref[...] = jnp.dot(x, wv_ref[...].astype(_COMPUTE_DTYPE),
                                 preferred_element_type=jnp.float32).astype(v_ref.dtype)
        return kernel

    def kernel(x_ref, wq_ref, wk_ref, wv_ref, q_ref, k_ref, v_ref,
               acc_q, acc_k, acc_v):
        @pl.when(pl.program_id(2) == 0)
        def _():
            acc_q[...] = jnp.zeros_like(acc_q)
            acc_k[...] = jnp.zeros_like(acc_k)
            acc_v[...] = jnp.zeros_like(acc_v)

        x = x_ref[...].astype(_COMPUTE_DTYPE)
        acc_q[...] += jnp.dot(x, wq_ref[...].astype(_COMPUTE_DTYPE),
                              preferred_element_type=jnp.float32)
        acc_k[...] += jnp.dot(x, wk_ref[...].astype(_COMPUTE_DTYPE),
                              preferred_element_type=jnp.float32)
        acc_v[...] += jnp.dot(x, wv_ref[...].astype(_COMPUTE_DTYPE),
                              preferred_element_type=jnp.float32)

        @pl.when(pl.program_id(2) == pl.num_programs(2) - 1)
        def _():
            q_ref[...] = (acc_q[...] * q_scale).astype(q_ref.dtype)
            k_ref[...] = acc_k[...].astype(k_ref.dtype)
            v_ref[...] = acc_v[...].astype(v_ref.dtype)
    return kernel


def pallas_qkv_proj(x2d, w_qkv, q_scale, *, mm_cap=None, tk_cap=None):
    """x2d: [M, K]; w_qkv: [K, 3C]. Returns bf16 (q, k, v), each [M, C], q pre-scaled."""
    M, K = x2d.shape
    K2, C3 = w_qkv.shape
    assert K == K2
    C = C3 // 3
    assert 3 * C == C3
    mm_cap = _BUDGET["mm_cap"] if mm_cap is None else mm_cap
    tk_cap = _BUDGET["tk_cap"] if tk_cap is None else tk_cap

    if C % 128 != 0:
        # Lane-aligned column blocks into the packed [K, 3C] weight are not legal here;
        # fall back to three matmuls over contiguous wrapper-side weight slices.
        q = pallas_matmul(x2d, w_qkv[:, :C], out_dtype=_COMPUTE_DTYPE,
                          out_scale=q_scale, mm_cap=mm_cap, tk_cap=tk_cap)
        k = pallas_matmul(x2d, w_qkv[:, C:2 * C], out_dtype=_COMPUTE_DTYPE,
                          mm_cap=mm_cap, tk_cap=tk_cap)
        v = pallas_matmul(x2d, w_qkv[:, 2 * C:], out_dtype=_COMPUTE_DTYPE,
                          mm_cap=mm_cap, tk_cap=tk_cap)
        return q, k, v

    tm = _pick_tile(M, mm_cap, 16)
    tn = _pick_tile(C, mm_cap, 128)
    tk = _pick_tile(K, tk_cap, 128)
    nk = K // tk
    nj = C // tn
    multi_k = nk > 1

    kernel = _make_qkv_kernel(multi_k, q_scale)

    if multi_k:
        grid = (M // tm, nj, nk)
        in_specs = [
            pl.BlockSpec((tm, tk), lambda i, j, k: (i, k)),
            pl.BlockSpec((tk, tn), lambda i, j, k: (k, j)),
            pl.BlockSpec((tk, tn), lambda i, j, k: (k, j + nj)),
            pl.BlockSpec((tk, tn), lambda i, j, k: (k, j + 2 * nj)),
        ]
        out_specs = [pl.BlockSpec((tm, tn), lambda i, j, k: (i, j)) for _ in range(3)]
        scratch = [pltpu.VMEM((tm, tn), jnp.float32) for _ in range(3)]
        semantics = ("parallel", "parallel", "arbitrary")
    else:
        grid = (M // tm, nj)
        in_specs = [
            pl.BlockSpec((tm, K), lambda i, j: (i, 0)),
            pl.BlockSpec((K, tn), lambda i, j: (0, j)),
            pl.BlockSpec((K, tn), lambda i, j: (0, j + nj)),
            pl.BlockSpec((K, tn), lambda i, j: (0, j + 2 * nj)),
        ]
        out_specs = [pl.BlockSpec((tm, tn), lambda i, j: (i, j)) for _ in range(3)]
        scratch = []
        semantics = ("parallel", "parallel")

    out_shape = tuple(jax.ShapeDtypeStruct((M, C), _COMPUTE_DTYPE) for _ in range(3))
    return pl.pallas_call(
        kernel,
        out_shape=out_shape,
        grid=grid,
        in_specs=in_specs,
        out_specs=out_specs,
        scratch_shapes=scratch,
        compiler_params=pltpu.CompilerParams(
            dimension_semantics=semantics,
            vmem_limit_bytes=_BUDGET["vmem_limit"],
        ),
        cost_estimate=pl.CostEstimate(
            flops=2 * M * K * 3 * C,
            transcendentals=0,
            bytes_accessed=int(int(x2d.dtype.itemsize) * M * K
                               + int(w_qkv.dtype.itemsize) * K * 3 * C
                               + 2 * M * 3 * C),
        ),
    )(x2d, w_qkv, w_qkv, w_qkv)


# ---------------------------------------------------------------------------
# kv-tiled online-softmax (flash) attention core: all heads per grid step,
# lane-dense (tq, C) accumulator and output stores.
# ---------------------------------------------------------------------------
def _make_flash_kernel(num_heads, n_valid, n_padded):
    masked = n_padded != n_valid  # static: padded kv columns exist only in the last block

    def kernel(q_ref, k_ref, v_ref, o_ref, m_sc, l_sc, acc_sc):
        ki = pl.program_id(2)

        @pl.when(ki == 0)
        def _():
            m_sc[...] = jnp.full_like(m_sc, -jnp.inf)
            l_sc[...] = jnp.zeros_like(l_sc)
            acc_sc[...] = jnp.zeros_like(acc_sc)

        tq = q_ref.shape[1]
        tkv = k_ref.shape[1]
        C = q_ref.shape[2]
        hd = C // num_heads

        if masked:
            col = ki * tkv + jax.lax.broadcasted_iota(jnp.int32, (tq, tkv), 1)
            kv_valid = col < n_valid

        alphas, pvs = [], []
        for h in range(num_heads):
            lo = h * hd
            q = q_ref[0, :, lo:lo + hd]      # (tq, hd) bf16, pre-scaled by head_dim**-0.5
            k = k_ref[0, :, lo:lo + hd]      # (tkv, hd) bf16
            v = v_ref[0, :, lo:lo + hd]      # (tkv, hd) bf16
            s = jax.lax.dot_general(q, k, (((1,), (1,)), ((), ())),
                                    preferred_element_type=jnp.float32)   # (tq, tkv)
            if masked:
                s = jnp.where(kv_valid, s, -jnp.inf)
            m_prev = m_sc[h]                                              # (tq, 1)
            m_new = jnp.maximum(m_prev, jnp.max(s, axis=-1, keepdims=True))
            alpha = jnp.exp(m_prev - m_new)                               # (tq, 1)
            p = jnp.exp(s - m_new)                                        # (tq, tkv)
            l_sc[h] = alpha * l_sc[h] + jnp.sum(p, axis=-1, keepdims=True)
            m_sc[h] = m_new
            pvs.append(jnp.dot(p.astype(v.dtype), v,
                               preferred_element_type=jnp.float32))       # (tq, hd)
            alphas.append(jnp.broadcast_to(alpha, (tq, hd)))

        # One lane-dense f32 read-modify-write of the accumulator covering all heads.
        acc_sc[...] = (jnp.concatenate(alphas, axis=-1) * acc_sc[...]
                       + jnp.concatenate(pvs, axis=-1))

        @pl.when(ki == pl.num_programs(2) - 1)
        def _():
            invs = [jnp.broadcast_to(pl.reciprocal(l_sc[h], approx=True), (tq, hd))
                    for h in range(num_heads)]
            o_ref[0] = (acc_sc[...] * jnp.concatenate(invs, axis=-1)).astype(o_ref.dtype)

    return kernel


def pallas_flash_mhsa(q, k, v, num_heads, n_valid, seq_tile):
    """q, k, v: [B, Npad, C] bf16 (q pre-scaled). Returns [B, Npad, C] bf16."""
    B, N_pad, C = q.shape
    assert N_pad % seq_tile == 0
    tq = tkv = seq_tile
    # Grid: (B, q-tiles) are "parallel" (megacore split; when B == 1 the q-tile axis
    # still feeds the second TensorCore on v7x); kv is the innermost reduction axis.
    grid = (B, N_pad // tq, N_pad // tkv)
    kernel = _make_flash_kernel(num_heads, n_valid, N_pad)

    return pl.pallas_call(
        kernel,
        out_shape=jax.ShapeDtypeStruct((B, N_pad, C), q.dtype),
        grid=grid,
        in_specs=[
            pl.BlockSpec((1, tq, C), lambda b, qi, ki: (b, qi, 0)),
            pl.BlockSpec((1, tkv, C), lambda b, qi, ki: (b, ki, 0)),
            pl.BlockSpec((1, tkv, C), lambda b, qi, ki: (b, ki, 0)),
        ],
        out_specs=pl.BlockSpec((1, tq, C), lambda b, qi, ki: (b, qi, 0)),
        scratch_shapes=[
            pltpu.VMEM((num_heads, tq, 1), jnp.float32),   # running max m
            pltpu.VMEM((num_heads, tq, 1), jnp.float32),   # running sum l
            pltpu.VMEM((tq, C), jnp.float32),              # output accumulator
        ],
        compiler_params=pltpu.CompilerParams(
            dimension_semantics=("parallel", "parallel", "arbitrary"),
            vmem_limit_bytes=_BUDGET["vmem_limit"],
        ),
        cost_estimate=pl.CostEstimate(
            flops=4 * B * N_pad * N_pad * C,
            transcendentals=B * num_heads * N_pad * N_pad,
            bytes_accessed=int(2 * 4 * B * N_pad * C),
        ),
    )(q, k, v)


# ---------------------------------------------------------------------------
# Full Attention forward (glue in plain JAX, all hot paths in Pallas)
# ---------------------------------------------------------------------------
def attention_forward(x, params, num_heads, *, seq_cap=None, mm_cap=None, tk_cap=None):
    B, N, C = x.shape
    assert C % num_heads == 0
    head_dim = C // num_heads
    scale = head_dim ** (-0.5)
    seq_cap = _BUDGET["seq_cap"] if seq_cap is None else seq_cap

    # Sequence plan: one tile size shared by the q and kv axes of the flash kernel.
    # Padded kv columns are masked inside the kernel; padded q rows are sliced off.
    seq_tile = min(seq_cap, _round_up(N, 16))
    n_pad = _round_up(N, seq_tile)
    if n_pad != N:
        x = jnp.pad(x, ((0, 0), (0, n_pad - N), (0, 0)))
    x2d = x.reshape(B * n_pad, C)

    # QKV projection (qkv_bias=False default) -> three contiguous bf16 [B*n_pad, C]
    # arrays; softmax scale folded into q at writeback (one mul per q element, total).
    q, k, v = pallas_qkv_proj(x2d, params["w_qkv"], scale, mm_cap=mm_cap, tk_cap=tk_cap)
    q = q.reshape(B, n_pad, C)
    k = k.reshape(B, n_pad, C)
    v = v.reshape(B, n_pad, C)

    # kv-tiled online-softmax attention over all heads.
    o = pallas_flash_mhsa(q, k, v, num_heads, N, seq_tile)      # [B, n_pad, C] bf16

    # attn_drop / proj_drop are p=0.0 (module defaults) -> identity.
    out = pallas_matmul(o.reshape(B * n_pad, C), params["w_proj"], params["b_proj"],
                        out_dtype=x.dtype, mm_cap=mm_cap, tk_cap=tk_cap)
    out = out.reshape(B, n_pad, C)
    return out[:, :N, :] if n_pad != N else out


# ---------------------------------------------------------------------------
# References
# ---------------------------------------------------------------------------
def reference_forward(x, params, num_heads):
    """Module-faithful f32 reference."""
    B, N, C = x.shape
    hd = C // num_heads
    scale = hd ** (-0.5)
    qkv = x @ params["w_qkv"]
    qkv = qkv.reshape(B, N, 3, num_heads, hd).transpose(2, 0, 3, 1, 4)
    q, k, v = qkv[0], qkv[1], qkv[2]
    attn = jnp.einsum("bhqd,bhkd->bhqk", q, k) * scale
    attn = jax.nn.softmax(attn, axis=-1)
    o = jnp.einsum("bhqk,bhkd->bhqd", attn, v)
    o = o.transpose(0, 2, 1, 3).reshape(B, N, C)
    return o @ params["w_proj"] + params["b_proj"]


def reference_forward_mixed(x, params, num_heads):
    """Reference mirroring the kernel's bf16-operand / f32-accumulate numerics."""
    B, N, C = x.shape
    hd = C // num_heads
    scale = hd ** (-0.5)
    bf = jnp.bfloat16
    xb = x.astype(bf)
    qkv = jnp.einsum("bnc,cd->bnd", xb, params["w_qkv"].astype(bf),
                     preferred_element_type=jnp.float32)
    q, k, v = jnp.split(qkv, 3, axis=-1)
    q = (q * scale).astype(bf)
    k = k.astype(bf)
    v = v.astype(bf)
    qh = q.reshape(B, N, num_heads, hd).transpose(0, 2, 1, 3)
    kh = k.reshape(B, N, num_heads, hd).transpose(0, 2, 1, 3)
    vh = v.reshape(B, N, num_heads, hd).transpose(0, 2, 1, 3)
    s = jnp.einsum("bhqd,bhkd->bhqk", qh, kh, preferred_element_type=jnp.float32)
    p = jax.nn.softmax(s, axis=-1)
    o = jnp.einsum("bhqk,bhkd->bhqd", p.astype(bf), vh,
                   preferred_element_type=jnp.float32)
    o = o.transpose(0, 2, 1, 3).reshape(B, N, C).astype(bf)
    out = jnp.einsum("bnc,cd->bnd", o, params["w_proj"].astype(bf),
                     preferred_element_type=jnp.float32)
    return out + params["b_proj"]


# ---------------------------------------------------------------------------
if __name__ == "__main__":
    key = jax.random.PRNGKey(0)
    cases = [
        # (name, B, N, C, heads, overrides)
        ("base", 2, 16, 128, 8, {}),                               # single-K projections, single kv tile
        ("tiled", 1, 200, 256, 8, dict(seq_cap=128, tk_cap=128)),  # multi-K accum, flash kv tiling,
                                                                   # padded/masked kv columns
        ("odd_c", 1, 16, 64, 4, {}),                               # C % 128 != 0 fallback QKV path
    ]
    for name, B, N, C, H, overrides in cases:
        key, kx, kq, kp, kb = jax.random.split(key, 5)
        x = jax.random.normal(kx, (B, N, C), dtype=jnp.float32)
        params = {
            "w_qkv": jax.random.normal(kq, (C, 3 * C), dtype=jnp.float32) * (C ** -0.5),
            "w_proj": jax.random.normal(kp, (C, C), dtype=jnp.float32) * (C ** -0.5),
            "b_proj": jax.random.normal(kb, (C,), dtype=jnp.float32) * 0.01,
        }
        out = jax.block_until_ready(attention_forward(x, params, H, **overrides))
        assert out.shape == (B, N, C), (name, out.shape)

        ref_mx = reference_forward_mixed(x, params, H)
        ref_fp = reference_forward(x, params, H)
        err_mx = float(jnp.max(jnp.abs(out - ref_mx)))
        err_fp = float(jnp.max(jnp.abs(out - ref_fp)))
        # Tight check vs. a reference that mirrors the kernel's bf16/f32 numerics;
        # loose sanity check vs. the pure-f32 module semantics (bf16 MXU rounding dominates).
        assert jnp.allclose(out, ref_mx, atol=5e-2, rtol=5e-2), (name, err_mx)
        assert jnp.allclose(out, ref_fp, atol=2e-1, rtol=2e-1), (name, err_fp)

    print("KERNEL_OK")
</pallas_src>

<mosaic_0001>
module attributes {stable_mosaic.version = 11 : i64} {
  func.func @kernel(%arg0: i32, %arg1: i32, %arg2: memref<32x128xf32, #tpu.memory_space<vmem>>, %arg3: memref<128x128xf32, #tpu.memory_space<vmem>>, %arg4: memref<128x128xf32, #tpu.memory_space<vmem>>, %arg5: memref<128x128xf32, #tpu.memory_space<vmem>>, %arg6: memref<32x128xbf16, #tpu.memory_space<vmem>>, %arg7: memref<32x128xbf16, #tpu.memory_space<vmem>>, %arg8: memref<32x128xbf16, #tpu.memory_space<vmem>>) attributes {dimension_semantics = [#tpu.dimension_semantics<parallel>, #tpu.dimension_semantics<parallel>], iteration_bounds = array<i64: 1, 1>, scalar_prefetch = 0 : i64, scratch_operands = 0 : i64, tpu.core_type = #tpu.core_type<tc>, window_params = [{transform_indices = @transform_0, window_bounds = array<i64: 32, 128>}, {transform_indices = @transform_1, window_bounds = array<i64: 128, 128>}, {transform_indices = @transform_2, window_bounds = array<i64: 128, 128>}, {transform_indices = @transform_3, window_bounds = array<i64: 128, 128>}, {transform_indices = @transform_4, window_bounds = array<i64: 32, 128>}, {transform_indices = @transform_5, window_bounds = array<i64: 32, 128>}, {transform_indices = @transform_6, window_bounds = array<i64: 32, 128>}]} {
    %c0 = arith.constant 0 : index
    %c0_0 = arith.constant 0 : index
    %0 = vector.load %arg2[%c0, %c0_0] : memref<32x128xf32, #tpu.memory_space<vmem>>, vector<32x128xf32>
    %1 = arith.truncf %0 : vector<32x128xf32> to vector<32x128xbf16>
    %c0_1 = arith.constant 0 : index
    %c0_2 = arith.constant 0 : index
    %2 = vector.load %arg3[%c0_1, %c0_2] : memref<128x128xf32, #tpu.memory_space<vmem>>, vector<128x128xf32>
    %3 = arith.truncf %2 : vector<128x128xf32> to vector<128x128xbf16>
    %cst = arith.constant dense<0.000000e+00> : vector<32x128xf32>
    %4 = tpu.matmul %1, %3, %cst {dimension_numbers = #tpu.dot_dimension_numbers<[1], [0], [0], [1], [0, 0, 1, 1], [], []>} : vector<32x128xbf16>, vector<128x128xbf16>, vector<32x128xf32> -> vector<32x128xf32>
    %cst_3 = arith.constant 2.500000e-01 : f32
    %5 = vector.broadcast %cst_3 : f32 to vector<32x128xf32>
    %6 = arith.mulf %4, %5 : vector<32x128xf32>
    %7 = arith.truncf %6 : vector<32x128xf32> to vector<32x128xbf16>
    %c0_4 = arith.constant 0 : index
    %c0_5 = arith.constant 0 : index
    %8 = vector.load %arg6[%c0_4, %c0_5] : memref<32x128xbf16, #tpu.memory_space<vmem>>, vector<32x128xbf16>
    tpu.vector_store %arg6[%c0_4, %c0_5], %7 {strides = array<i32>} : memref<32x128xbf16, #tpu.memory_space<vmem>>, vector<32x128xbf16>,
    %c0_6 = arith.constant 0 : index
    %c0_7 = arith.constant 0 : index
    %9 = vector.load %arg4[%c0_6, %c0_7] : memref<128x128xf32, #tpu.memory_space<vmem>>, vector<128x128xf32>
    %10 = arith.truncf %9 : vector<128x128xf32> to vector<128x128xbf16>
    %cst_8 = arith.constant dense<0.000000e+00> : vector<32x128xf32>
    %11 = tpu.matmul %1, %10, %cst_8 {dimension_numbers = #tpu.dot_dimension_numbers<[1], [0], [0], [1], [0, 0, 1, 1], [], []>} : vector<32x128xbf16>, vector<128x128xbf16>, vector<32x128xf32> -> vector<32x128xf32>
    %12 = arith.truncf %11 : vector<32x128xf32> to vector<32x128xbf16>
    %c0_9 = arith.constant 0 : index
    %c0_10 = arith.constant 0 : index
    %13 = vector.load %arg7[%c0_9, %c0_10] : memref<32x128xbf16, #tpu.memory_space<vmem>>, vector<32x128xbf16>
    tpu.vector_store %arg7[%c0_9, %c0_10], %12 {strides = array<i32>} : memref<32x128xbf16, #tpu.memory_space<vmem>>, vector<32x128xbf16>,
    %c0_11 = arith.constant 0 : index
    %c0_12 = arith.constant 0 : index
    %14 = vector.load %arg5[%c0_11, %c0_12] : memref<128x128xf32, #tpu.memory_space<vmem>>, vector<128x128xf32>
    %15 = arith.truncf %14 : vector<128x128xf32> to vector<128x128xbf16>
    %cst_13 = arith.constant dense<0.000000e+00> : vector<32x128xf32>
    %16 = tpu.matmul %1, %15, %cst_13 {dimension_numbers = #tpu.dot_dimension_numbers<[1], [0], [0], [1], [0, 0, 1, 1], [], []>} : vector<32x128xbf16>, vector<128x128xbf16>, vector<32x128xf32> -> vector<32x128xf32>
    %17 = arith.truncf %16 : vector<32x128xf32> to vector<32x128xbf16>
    %c0_14 = arith.constant 0 : index
    %c0_15 = arith.constant 0 : index
    %18 = vector.load %arg8[%c0_14, %c0_15] : memref<32x128xbf16, #tpu.memory_space<vmem>>, vector<32x128xbf16>
    tpu.vector_store %arg8[%c0_14, %c0_15], %17 {strides = array<i32>} : memref<32x128xbf16, #tpu.memory_space<vmem>>, vector<32x128xbf16>,
    return
  }
  func.func @transform_0(%arg0: i32, %arg1: i32) -> (i32, i32) {
    %c0_i32 = arith.constant 0 : i32
    %c0_i32_0 = arith.constant 0 : i32
    return %arg0, %c0_i32 : i32, i32
  }
  func.func @transform_1(%arg0: i32, %arg1: i32) -> (i32, i32) {
    %c0_i32 = arith.constant 0 : i32
    %c0_i32_0 = arith.constant 0 : i32
    return %c0_i32, %arg1 : i32, i32
  }
  func.func @transform_2(%arg0: i32, %arg1: i32) -> (i32, i32) {
    %c1_i32 = arith.constant 1 : i32
    %0 = arith.addi %arg1, %c1_i32 : i32
    %c0_i32 = arith.constant 0 : i32
    %c0_i32_0 = arith.constant 0 : i32
    return %c0_i32, %0 : i32, i32
  }
  func.func @transform_3(%arg0: i32, %arg1: i32) -> (i32, i32) {
    %c2_i32 = arith.constant 2 : i32
    %0 = arith.addi %arg1, %c2_i32 : i32
    %c0_i32 = arith.constant 0 : i32
    %c0_i32_0 = arith.constant 0 : i32
    return %c0_i32, %0 : i32, i32
  }
  func.func @transform_4(%arg0: i32, %arg1: i32) -> (i32, i32) {
    %c0_i32 = arith.constant 0 : i32
    return %arg0, %arg1 : i32, i32
  }
  func.func @transform_5(%arg0: i32, %arg1: i32) -> (i32, i32) {
    %c0_i32 = arith.constant 0 : i32
    return %arg0, %arg1 : i32, i32
  }
  func.func @transform_6(%arg0: i32, %arg1: i32) -> (i32, i32) {
    %c0_i32 = arith.constant 0 : i32
    return %arg0, %arg1 : i32, i32
  }
}

</mosaic_0001>

<llo_original>
// kernel: tpu_custom_call.1
$region0: #{tpu_custom_call.1}
  #allocation0 [shape = 'u32[]', space=smem, size = 0x4, offset = 0x4, fixed_abs, tag = 'smem constant byte address 0x4 - core index']
  #allocation1 [shape = 'u32[144,128]{1,0:T(1,128)}', space=vmem, size = 0x12000, scoped, tag = 'internal scratch']
  %s0 = inlined_call_operand.hbm [shape: f32[32,128], index: 0, kind: input, shape index: {}]
  %s1 = inlined_call_operand.hbm [shape: f32[128,384], index: 1, kind: input, shape index: {}]
  %s2 = inlined_call_operand.hbm [shape: f32[128,384], index: 2, kind: input, shape index: {}]
  %s3 = inlined_call_operand.hbm [shape: f32[128,384], index: 3, kind: input, shape index: {}]
  %s4 = inlined_call_operand.hbm [shape: bf16[32,128], index: 4, kind: output, shape index: {0}]
  %s5 = inlined_call_operand.hbm [shape: bf16[32,128], index: 5, kind: output, shape index: {1}]
  %s6 = inlined_call_operand.hbm [shape: bf16[32,128], index: 6, kind: output, shape index: {2}]
  %7 = xla_tuple %s4, %s5, %s6
  %s8 = sld [smem:[#allocation0]]
  $region58: #{tpu_custom_call.1} parent=0
    _
  %s10 = ssub.s32 1, %s8
  %s11 = scalar_select 0, %s10, %s8
  $region1: #{tpu_custom_call.1} parent=0
    #allocation2 [shape = 'u8[16384]{0}', space=vmem, size = 0x4000, scoped, tag = 'input window, operand 0, single buffered']
    #allocation3 [shape = 's32[1]{0}', space=sflag, size = 0x4, scoped, tag = 'scoped memory for tpu_custom_call.1']
    #allocation4 [shape = 's32[1]{0}', space=sflag, size = 0x4, scoped, tag = 'scoped memory for tpu_custom_call.1']
    #allocation5 [shape = 'u8[65536]{0}', space=vmem, size = 0x10000, scoped, tag = 'input window, operand 1, single buffered']
    #allocation6 [shape = 's32[1]{0}', space=sflag, size = 0x4, scoped, tag = 'scoped memory for tpu_custom_call.1']
    #allocation7 [shape = 'u8[65536]{0}', space=vmem, size = 0x10000, scoped, tag = 'input window, operand 2, single buffered']
    #allocation8 [shape = 'u8[65536]{0}', space=vmem, size = 0x10000, scoped, tag = 'input window, operand 3, single buffered']
    #allocation9 [shape = 's32[1]{0}', space=sflag, size = 0x4, scoped, tag = 'scoped memory for tpu_custom_call.1']
    #allocation10 [shape = 'u8[8192]{0}', space=vmem, size = 0x2000, scoped, tag = 'output window, operand 0, single buffered']
    #allocation11 [shape = 'u8[8192]{0}', space=vmem, size = 0x2000, scoped, tag = 'output window, operand 1, single buffered']
    #allocation12 [shape = 's32[1]{0}', space=sflag, size = 0x4, scoped, tag = 'scoped memory for tpu_custom_call.1']
    #allocation13 [shape = 'u8[8192]{0}', space=vmem, size = 0x2000, scoped, tag = 'output window, operand 2, single buffered']
    %12 = vsyncpa [#allocation3], 0
    %13 = vsyncpa [#allocation6], 0
    %14 = vsyncpa [#allocation9], 0
    %15 = vsyncpa [#allocation4], 0
    %16 = vsyncpa [#allocation12], 0
    // Predicated region
    $region2: #{tpu_custom_call.1} parent=1 // pred_check
      _
    $region3: #{tpu_custom_call.1} parent=1 // pred_check_branch
      %18 = sbr.rel (0) target = $region5
    $region4: #{tpu_custom_call.1} parent=1 // pred_region
      %s20 = ssub.s32 512, 512
      %21 = vsyncadd [#allocation3], %s20
      %s22 = sshll.u32 [#allocation2], 4
      %s23 = int_to_ptr.vmem [resolvable:$true] %s22
      %28 = dma.hbm_to_vmem [thread:$0]  %s0, 512, %s23, [#allocation3], 128, 128, 8
    $region5: #{tpu_custom_call.1} parent=1 // pred_fallthru
      _
    // Predicated region
    $region6: #{tpu_custom_call.1} parent=1 // pred_check
      _
    $region7: #{tpu_custom_call.1} parent=1 // pred_check_branch
      %30 = sbr.rel (0) target = $region9
    $region8: #{tpu_custom_call.1} parent=1 // pred_region
      %s32 = ssub.s32 2048, 2048
      %33 = vsyncadd [#allocation6], %s32
      %s34 = sshll.u32 [#allocation5], 4
      %s35 = int_to_ptr.vmem [resolvable:$true] %s34
      %40 = dma.hbm_to_vmem [thread:$0]  %s1, 2048, %s35, [#allocation6], 384, 128, 8
    $region9: #{tpu_custom_call.1} parent=1 // pred_fallthru
      _
    // Predicated region
    $region10: #{tpu_custom_call.1} parent=1 // pred_check
      _
    $region11: #{tpu_custom_call.1} parent=1 // pred_check_branch
      %42 = sbr.rel (0) target = $region13
    $region12: #{tpu_custom_call.1} parent=1 // pred_region
      %s43 = sadd.s32 0, 1
      %s45 = ssub.s32 2048, 2048
      %46 = vsyncadd [#allocation6], %s45
      %s47 = smul.addr %s43, 128
      %s48 = scalar_lea.hbm %s2, %s47
      %s49 = sshll.u32 [#allocation7], 4
      %s50 = int_to_ptr.vmem [resolvable:$true] %s49
      %55 = dma.hbm_to_vmem [thread:$0]  %s48, 2048, %s50, [#allocation6], 384, 128, 8
    $region13: #{tpu_custom_call.1} parent=1 // pred_fallthru
      _
    // Predicated region
    $region14: #{tpu_custom_call.1} parent=1 // pred_check
      _
    $region15: #{tpu_custom_call.1} parent=1 // pred_check_branch
      %57 = sbr.rel (0) target = $region17
    $region16: #{tpu_custom_call.1} parent=1 // pred_region
      %s58 = sadd.s32 0, 2
      %s60 = ssub.s32 2048, 2048
      %61 = vsyncadd [#allocation9], %s60
      %s62 = smul.addr %s58, 128
      %s63 = scalar_lea.hbm %s3, %s62
      %s64 = sshll.u32 [#allocation8], 4
      %s65 = int_to_ptr.vmem [resolvable:$true] %s64
      %70 = dma.hbm_to_vmem [thread:$0]  %s63, 2048, %s65, [#allocation9], 384, 128, 8
    $region17: #{tpu_custom_call.1} parent=1 // pred_fallthru
      _
    // Predicated region
    $region18: #{tpu_custom_call.1} parent=1 // pred_check
      _
    $region19: #{tpu_custom_call.1} parent=1 // pred_check_branch
      %72 = sbr.rel (0) target = $region21
    $region20: #{tpu_custom_call.1} parent=1 // pred_region
      %73 = dma.done [#allocation3], 512
    $region21: #{tpu_custom_call.1} parent=1 // pred_fallthru
      _
    // Predicated region
    $region22: #{tpu_custom_call.1} parent=1 // pred_check
      _
    $region23: #{tpu_custom_call.1} parent=1 // pred_check_branch
      %75 = sbr.rel (0) target = $region25
    $region24: #{tpu_custom_call.1} parent=1 // pred_region
      %76 = dma.done [#allocation6], 2048
    $region25: #{tpu_custom_call.1} parent=1 // pred_fallthru
      _
    // Predicated region
    $region26: #{tpu_custom_call.1} parent=1 // pred_check
      _
    $region27: #{tpu_custom_call.1} parent=1 // pred_check_branch
      %78 = sbr.rel (0) target = $region29
    $region28: #{tpu_custom_call.1} parent=1 // pred_region
      %79 = dma.done [#allocation6], 2048
    $region29: #{tpu_custom_call.1} parent=1 // pred_fallthru
      _
    // Predicated region
    $region30: #{tpu_custom_call.1} parent=1 // pred_check
      _
    $region31: #{tpu_custom_call.1} parent=1 // pred_check_branch
      %81 = sbr.rel (0) target = $region33
    $region32: #{tpu_custom_call.1} parent=1 // pred_region
      %82 = dma.done [#allocation9], 2048
    $region33: #{tpu_custom_call.1} parent=1 // pred_fallthru
      _
    %s83 = sadd.s32 0, 1
    %s84 = sadd.s32 0, 2
    %v86 = vld [vmem:[#allocation2] sm:$0xff]
    %v87 = vld [vmem:[#allocation2 + $0x8] sm:$0xff]
    %v88 = vld [vmem:[#allocation2 + $0x10] sm:$0xff]
    %v89 = vld [vmem:[#allocation2 + $0x18] sm:$0xff]
    %v90 = vpack.c.bf16 %v87, %v86
    %v91 = vpack.c.bf16 %v89, %v88
    %v92 = vld [vmem:[#allocation5] sm:$0xff]
    %v93 = vld [vmem:[#allocation5 + $0x8] sm:$0xff]
    %v94 = vld [vmem:[#allocation5 + $0x10] sm:$0xff]
    %v95 = vld [vmem:[#allocation5 + $0x18] sm:$0xff]
    %v96 = vld [vmem:[#allocation5 + $0x20] sm:$0xff]
    %v97 = vld [vmem:[#allocation5 + $0x28] sm:$0xff]
    %v98 = vld [vmem:[#allocation5 + $0x30] sm:$0xff]
    %v99 = vld [vmem:[#allocation5 + $0x38] sm:$0xff]
    %v100 = vld [vmem:[#allocation5 + $0x40] sm:$0xff]
    %v101 = vld [vmem:[#allocation5 + $0x48] sm:$0xff]
    %v102 = vld [vmem:[#allocation5 + $0x50] sm:$0xff]
    %v103 = vld [vmem:[#allocation5 + $0x58] sm:$0xff]
    %v104 = vld [vmem:[#allocation5 + $0x60] sm:$0xff]
    %v105 = vld [vmem:[#allocation5 + $0x68] sm:$0xff]
    %v106 = vld [vmem:[#allocation5 + $0x70] sm:$0xff]
    %v107 = vld [vmem:[#allocation5 + $0x78] sm:$0xff]
    %v108 = vpack.c.bf16 %v93, %v92
    %v109 = vpack.c.bf16 %v95, %v94
    %v110 = vpack.c.bf16 %v97, %v96
    %v111 = vpack.c.bf16 %v99, %v98
    %v112 = vpack.c.bf16 %v101, %v100
    %v113 = vpack.c.bf16 %v103, %v102
    %v114 = vpack.c.bf16 %v105, %v104
    %v115 = vpack.c.bf16 %v107, %v106
    %116 = vmatprep.subr.bf16.mxu0 0
    %117 = vmatpush1.bf16.msra.mxu0 %v115
    %118 = vmatprep.subr.bf16.mxu0 0
    %119 = vmatpush1.bf16.msra.mxu0 %v114
    %120 = vmatprep.subr.bf16.mxu0 0
    %121 = vmatpush1.bf16.msra.mxu0 %v113
    %122 = vmatprep.subr.bf16.mxu0 0
    %123 = vmatpush1.bf16.msra.mxu0 %v112
    %124 = vmatprep.subr.bf16.mxu0 0
    %125 = vmatpush1.bf16.msra.mxu0 %v111
    %126 = vmatprep.subr.bf16.mxu0 0
    %127 = vmatpush1.bf16.msra.mxu0 %v110
    %128 = vmatprep.subr.bf16.mxu0 0
    %129 = vmatpush1.bf16.msra.mxu0 %v109
    %130 = vmatprep.subr.bf16.mxu0 0
    %131 = vmatpush1.bf16.msra.mxu0 %v108
    %132 = vmatprep.subr.bf16.mxu0 0
    %133 = vmatpush2.bf16.msra.mxu0 0
    %134 = vmatprep.subr.bf16.mxu0 0
    %135 = vmatpush2.bf16.msra.mxu0 0
    %136 = vmatprep.subr.bf16.mxu0 0
    %137 = vmatpush2.bf16.msra.mxu0 0
    %138 = vmatprep.subr.bf16.mxu0 0
    %139 = vmatpush2.bf16.msra.mxu0 0
    %140 = vmatprep.subr.bf16.mxu0 0
    %141 = vmatpush2.bf16.msra.mxu0 0
    %142 = vmatprep.subr.bf16.mxu0 0
    %143 = vmatpush2.bf16.msra.mxu0 0
    %144 = vmatprep.subr.bf16.mxu0 0
    %145 = vmatpush2.bf16.msra.mxu0 0
    %146 = vmatprep.subr.bf16.mxu0 0
    %147 = vmatpush2.bf16.msra.mxu0 0
    %148 = vmatprep.mubr.bf16.mxu0 0
    %149 = vmatmul.mubr.bf16.gmra.mxu0 %v90
    %v150 = vpop.f32.mrf.mxu0
    %v151 = vadd.f32 0.0, %v150
    %v152 = vpop.f32.mrf.mxu0
    %v153 = vpop.f32.mrf.mxu0
    %v154 = vadd.f32 0.0, %v153
    %v155 = vpop.f32.mrf.mxu0
    %156 = vmatprep.mubr.bf16.mxu0 0
    %157 = vmatmul.mubr.bf16.gmra.mxu0 %v91
    %v158 = vpop.f32.mrf.mxu0
    %v159 = vadd.f32 0.0, %v158
    %v160 = vpop.f32.mrf.mxu0
    %v161 = vpop.f32.mrf.mxu0
    %v162 = vadd.f32 0.0, %v161
    %v163 = vpop.f32.mrf.mxu0
    %164 = vdwg.mxu0
    %v165 = vmul.f32 %v151, 0.25
    %v166 = vmul.f32 %v154, 0.25
    %v167 = vmul.f32 %v159, 0.25
    %v168 = vmul.f32 %v162, 0.25
    %v169 = vpack.c.bf16 %v166, %v165
    %v170 = vpack.c.bf16 %v168, %v167
    %v173 = vunpack.c.l.b16 %v169
    %v174 = vunpack.c.h.b16 %v169
    %v175 = vunpack.c.l.b16 %v170
    %v176 = vunpack.c.h.b16 %v170
    %v177 = vpack.c.b16 %v173, %v173
    %v178 = vpack.c.b16 %v174, %v174
    %v179 = vpack.c.b16 %v175, %v175
    %v180 = vpack.c.b16 %v176, %v176
    %185 = vst [vmem:[#allocation10] sm:$0xf] %v177
    %186 = vst [vmem:[#allocation10 + $0x4] sm:$0xf] %v178
    %187 = vst [vmem:[#allocation10 + $0x8] sm:$0xf] %v179
    %188 = vst [vmem:[#allocation10 + $0xc] sm:$0xf] %v180
    %v189 = vld [vmem:[#allocation7] sm:$0xff]
    %v190 = vld [vmem:[#allocation7 + $0x8] sm:$0xff]
    %v191 = vld [vmem:[#allocation7 + $0x10] sm:$0xff]
    %v192 = vld [vmem:[#allocation7 + $0x18] sm:$0xff]
    %v193 = vld [vmem:[#allocation7 + $0x20] sm:$0xff]
    %v194 = vld [vmem:[#allocation7 + $0x28] sm:$0xff]
    %v195 = vld [vmem:[#allocation7 + $0x30] sm:$0xff]
    %v196 = vld [vmem:[#allocation7 + $0x38] sm:$0xff]
    %v197 = vld [vmem:[#allocation7 + $0x40] sm:$0xff]
    %v198 = vld [vmem:[#allocation7 + $0x48] sm:$0xff]
    %v199 = vld [vmem:[#allocation7 + $0x50] sm:$0xff]
    %v200 = vld [vmem:[#allocation7 + $0x58] sm:$0xff]
    %v201 = vld [vmem:[#allocation7 + $0x60] sm:$0xff]
    %v202 = vld [vmem:[#allocation7 + $0x68] sm:$0xff]
    %v203 = vld [vmem:[#allocation7 + $0x70] sm:$0xff]
    %v204 = vld [vmem:[#allocation7 + $0x78] sm:$0xff]
    %v205 = vpack.c.bf16 %v190, %v189
    %v206 = vpack.c.bf16 %v192, %v191
    %v207 = vpack.c.bf16 %v194, %v193
    %v208 = vpack.c.bf16 %v196, %v195
    %v209 = vpack.c.bf16 %v198, %v197
    %v210 = vpack.c.bf16 %v200, %v199
    %v211 = vpack.c.bf16 %v202, %v201
    %v212 = vpack.c.bf16 %v204, %v203
    %213 = vmatprep.subr.bf16.mxu0 0
    %214 = vmatpush1.bf16.msra.mxu0 %v212
    %215 = vmatprep.subr.bf16.mxu0 0
    %216 = vmatpush1.bf16.msra.mxu0 %v211
    %217 = vmatprep.subr.bf16.mxu0 0
    %218 = vmatpush1.bf16.msra.mxu0 %v210
    %219 = vmatprep.subr.bf16.mxu0 0
    %220 = vmatpush1.bf16.msra.mxu0 %v209
    %221 = vmatprep.subr.bf16.mxu0 0
    %222 = vmatpush1.bf16.msra.mxu0 %v208
    %223 = vmatprep.subr.bf16.mxu0 0
    %224 = vmatpush1.bf16.msra.mxu0 %v207
    %225 = vmatprep.subr.bf16.mxu0 0
    %226 = vmatpush1.bf16.msra.mxu0 %v206
    %227 = vmatprep.subr.bf16.mxu0 0
    %228 = vmatpush1.bf16.msra.mxu0 %v205
    %229 = vmatprep.subr.bf16.mxu0 0
    %230 = vmatpush2.bf16.msra.mxu0 0
    %231 = vmatprep.subr.bf16.mxu0 0
    %232 = vmatpush2.bf16.msra.mxu0 0
    %233 = vmatprep.subr.bf16.mxu0 0
    %234 = vmatpush2.bf16.msra.mxu0 0
    %235 = vmatprep.subr.bf16.mxu0 0
    %236 = vmatpush2.bf16.msra.mxu0 0
    %237 = vmatprep.subr.bf16.mxu0 0
    %238 = vmatpush2.bf16.msra.mxu0 0
    %239 = vmatprep.subr.bf16.mxu0 0
    %240 = vmatpush2.bf16.msra.mxu0 0
    %241 = vmatprep.subr.bf16.mxu0 0
    %242 = vmatpush2.bf16.msra.mxu0 0
    %243 = vmatprep.subr.bf16.mxu0 0
    %244 = vmatpush2.bf16.msra.mxu0 0
    %245 = vmatprep.mubr.bf16.mxu0 0
    %246 = vmatmul.mubr.bf16.gmra.mxu0 %v90
    %v247 = vpop.f32.mrf.mxu0
    %v248 = vadd.f32 0.0, %v247
    %v249 = vpop.f32.mrf.mxu0
    %v250 = vpop.f32.mrf.mxu0
    %v251 = vadd.f32 0.0, %v250
    %v252 = vpop.f32.mrf.mxu0
    %253 = vmatprep.mubr.bf16.mxu0 0
    %254 = vmatmul.mubr.bf16.gmra.mxu0 %v91
    %v255 = vpop.f32.mrf.mxu0
    %v256 = vadd.f32 0.0, %v255
    %v257 = vpop.f32.mrf.mxu0
    %v258 = vpop.f32.mrf.mxu0
    %v259 = vadd.f32 0.0, %v258
    %v260 = vpop.f32.mrf.mxu0
    %261 = vdwg.mxu0
    %v262 = vpack.c.bf16 %v251, %v248
    %v263 = vpack.c.bf16 %v259, %v256
    %v266 = vunpack.c.l.b16 %v262
    %v267 = vunpack.c.h.b16 %v262
    %v268 = vunpack.c.l.b16 %v263
    %v269 = vunpack.c.h.b16 %v263
    %v270 = vpack.c.b16 %v266, %v266
    %v271 = vpack.c.b16 %v267, %v267
    %v272 = vpack.c.b16 %v268, %v268
    %v273 = vpack.c.b16 %v269, %v269
    %278 = vst [vmem:[#allocation11] sm:$0xf] %v270
    %279 = vst [vmem:[#allocation11 + $0x4] sm:$0xf] %v271
    %280 = vst [vmem:[#allocation11 + $0x8] sm:$0xf] %v272
    %281 = vst [vmem:[#allocation11 + $0xc] sm:$0xf] %v273
    %v282 = vld [vmem:[#allocation8] sm:$0xff]
    %v283 = vld [vmem:[#allocation8 + $0x8] sm:$0xff]
    %v284 = vld [vmem:[#allocation8 + $0x10] sm:$0xff]
    %v285 = vld [vmem:[#allocation8 + $0x18] sm:$0xff]
    %v286 = vld [vmem:[#allocation8 + $0x20] sm:$0xff]
    %v287 = vld [vmem:[#allocation8 + $0x28] sm:$0xff]
    %v288 = vld [vmem:[#allocation8 + $0x30] sm:$0xff]
    %v289 = vld [vmem:[#allocation8 + $0x38] sm:$0xff]
    %v290 = vld [vmem:[#allocation8 + $0x40] sm:$0xff]
    %v291 = vld [vmem:[#allocation8 + $0x48] sm:$0xff]
    %v292 = vld [vmem:[#allocation8 + $0x50] sm:$0xff]
    %v293 = vld [vmem:[#allocation8 + $0x58] sm:$0xff]
    %v294 = vld [vmem:[#allocation8 + $0x60] sm:$0xff]
    %v295 = vld [vmem:[#allocation8 + $0x68] sm:$0xff]
    %v296 = vld [vmem:[#allocation8 + $0x70] sm:$0xff]
    %v297 = vld [vmem:[#allocation8 + $0x78] sm:$0xff]
    %v298 = vpack.c.bf16 %v283, %v282
    %v299 = vpack.c.bf16 %v285, %v284
    %v300 = vpack.c.bf16 %v287, %v286
    %v301 = vpack.c.bf16 %v289, %v288
    %v302 = vpack.c.bf16 %v291, %v290
    %v303 = vpack.c.bf16 %v293, %v292
    %v304 = vpack.c.bf16 %v295, %v294
    %v305 = vpack.c.bf16 %v297, %v296
    %306 = vmatprep.subr.bf16.mxu0 0
    %307 = vmatpush1.bf16.msra.mxu0 %v305
    %308 = vmatprep.subr.bf16.mxu0 0
    %309 = vmatpush1.bf16.msra.mxu0 %v304
    %310 = vmatprep.subr.bf16.mxu0 0
    %311 = vmatpush1.bf16.msra.mxu0 %v303
    %312 = vmatprep.subr.bf16.mxu0 0
    %313 = vmatpush1.bf16.msra.mxu0 %v302
    %314 = vmatprep.subr.bf16.mxu0 0
    %315 = vmatpush1.bf16.msra.mxu0 %v301
    %316 = vmatprep.subr.bf16.mxu0 0
    %317 = vmatpush1.bf16.msra.mxu0 %v300
    %318 = vmatprep.subr.bf16.mxu0 0
    %319 = vmatpush1.bf16.msra.mxu0 %v299
    %320 = vmatprep.subr.bf16.mxu0 0
    %321 = vmatpush1.bf16.msra.mxu0 %v298
    %322 = vmatprep.subr.bf16.mxu0 0
    %323 = vmatpush2.bf16.msra.mxu0 0
    %324 = vmatprep.subr.bf16.mxu0 0
    %325 = vmatpush2.bf16.msra.mxu0 0
    %326 = vmatprep.subr.bf16.mxu0 0
    %327 = vmatpush2.bf16.msra.mxu0 0
    %328 = vmatprep.subr.bf16.mxu0 0
    %329 = vmatpush2.bf16.msra.mxu0 0
    %330 = vmatprep.subr.bf16.mxu0 0
    %331 = vmatpush2.bf16.msra.mxu0 0
    %332 = vmatprep.subr.bf16.mxu0 0
    %333 = vmatpush2.bf16.msra.mxu0 0
    %334 = vmatprep.subr.bf16.mxu0 0
    %335 = vmatpush2.bf16.msra.mxu0 0
    %336 = vmatprep.subr.bf16.mxu0 0
    %337 = vmatpush2.bf16.msra.mxu0 0
    %338 = vmatprep.mubr.bf16.mxu0 0
    %339 = vmatmul.mubr.bf16.gmra.mxu0 %v90
    %v340 = vpop.f32.mrf.mxu0
    %v341 = vadd.f32 0.0, %v340
    %v342 = vpop.f32.mrf.mxu0
    %v343 = vpop.f32.mrf.mxu0
    %v344 = vadd.f32 0.0, %v343
    %v345 = vpop.f32.mrf.mxu0
    %346 = vmatprep.mubr.bf16.mxu0 0
    %347 = vmatmul.mubr.bf16.gmra.mxu0 %v91
    %v348 = vpop.f32.mrf.mxu0
    %v349 = vadd.f32 0.0, %v348
    %v350 = vpop.f32.mrf.mxu0
    %v351 = vpop.f32.mrf.mxu0
    %v352 = vadd.f32 0.0, %v351
    %v353 = vpop.f32.mrf.mxu0
    %354 = vdwg.mxu0
    %v355 = vpack.c.bf16 %v344, %v341
    %v356 = vpack.c.bf16 %v352, %v349
    %v359 = vunpack.c.l.b16 %v355
    %v360 = vunpack.c.h.b16 %v355
    %v361 = vunpack.c.l.b16 %v356
    %v362 = vunpack.c.h.b16 %v356
    %v363 = vpack.c.b16 %v359, %v359
    %v364 = vpack.c.b16 %v360, %v360
    %v365 = vpack.c.b16 %v361, %v361
    %v366 = vpack.c.b16 %v362, %v362
    %371 = vst [vmem:[#allocation13] sm:$0xf] %v363
    %372 = vst [vmem:[#allocation13 + $0x4] sm:$0xf] %v364
    %373 = vst [vmem:[#allocation13 + $0x8] sm:$0xf] %v365
    %374 = vst [vmem:[#allocation13 + $0xc] sm:$0xf] %v366
    // Predicated region
    $region34: #{tpu_custom_call.1} parent=1 // pred_check
      _
    $region35: #{tpu_custom_call.1} parent=1 // pred_check_branch
      %376 = sbr.rel (0) target = $region37
    $region36: #{tpu_custom_call.1} parent=1 // pred_region
      %s378 = ssub.s32 256, 256
      %379 = vsyncadd [#allocation4], %s378
      %s380 = sshll.u32 [#allocation10], 4
      %s381 = int_to_ptr.vmem [resolvable:$true] %s380
      %386 = dma.vmem_to_hbm [thread:$0]  %s381, 256, %s4, [#allocation4], 64, 64, 4
    $region37: #{tpu_custom_call.1} parent=1 // pred_fallthru
      _
    // Predicated region
    $region38: #{tpu_custom_call.1} parent=1 // pred_check
      _
    $region39: #{tpu_custom_call.1} parent=1 // pred_check_branch
      %388 = sbr.rel (0) target = $region41
    $region40: #{tpu_custom_call.1} parent=1 // pred_region
      %s390 = ssub.s32 256, 256
      %391 = vsyncadd [#allocation12], %s390
      %s392 = sshll.u32 [#allocation11], 4
      %s393 = int_to_ptr.vmem [resolvable:$true] %s392
      %398 = dma.vmem_to_hbm [thread:$0]  %s393, 256, %s5, [#allocation12], 64, 64, 4
    $region41: #{tpu_custom_call.1} parent=1 // pred_fallthru
      _
    // Predicated region
    $region42: #{tpu_custom_call.1} parent=1 // pred_check
      _
    $region43: #{tpu_custom_call.1} parent=1 // pred_check_branch
      %400 = sbr.rel (0) target = $region45
    $region44: #{tpu_custom_call.1} parent=1 // pred_region
      %s402 = ssub.s32 256, 256
      %403 = vsyncadd [#allocation12], %s402
      %s404 = sshll.u32 [#allocation13], 4
      %s405 = int_to_ptr.vmem [resolvable:$true] %s404
      %410 = dma.vmem_to_hbm [thread:$0]  %s405, 256, %s6, [#allocation12], 64, 64, 4
    $region45: #{tpu_custom_call.1} parent=1 // pred_fallthru
      _
    // Predicated region
    $region46: #{tpu_custom_call.1} parent=1 // pred_check
      _
    $region47: #{tpu_custom_call.1} parent=1 // pred_check_branch
      %412 = sbr.rel (0) target = $region49
    $region48: #{tpu_custom_call.1} parent=1 // pred_region
      %413 = dma.done [#allocation4], 256
    $region49: #{tpu_custom_call.1} parent=1 // pred_fallthru
      _
    // Predicated region
    $region50: #{tpu_custom_call.1} parent=1 // pred_check
      _
    $region51: #{tpu_custom_call.1} parent=1 // pred_check_branch
      %415 = sbr.rel (0) target = $region53
    $region52: #{tpu_custom_call.1} parent=1 // pred_region
      %416 = dma.done [#allocation12], 256
    $region53: #{tpu_custom_call.1} parent=1 // pred_fallthru
      _
    // Predicated region
    $region54: #{tpu_custom_call.1} parent=1 // pred_check
      _
    $region55: #{tpu_custom_call.1} parent=1 // pred_check_branch
      %418 = sbr.rel (0) target = $region57
    $region56: #{tpu_custom_call.1} parent=1 // pred_region
      %419 = dma.done [#allocation12], 256
    $region57: #{tpu_custom_call.1} parent=1 // pred_fallthru
      _
    %420 = vsyncpa [#allocation3], 1
    %421 = vsyncpa [#allocation6], 1
    %422 = vsyncpa [#allocation9], 1
    %423 = vsyncpa [#allocation4], 1
    %424 = vsyncpa [#allocation12], 1

</llo_original>
